<compile_context>
chip_gen: v5e
topology: v5e:2x2
jax: 0.10.0
libtpu: 0.0.40
codegen_flags: <defaults>
</compile_context>

<pallas_src>
import functools

import jax
import jax.numpy as jnp
import numpy as np
from jax.experimental import pallas as pl
from jax.experimental.pallas import tpu as pltpu


# ----------------------------------------------------------------------------
# Fused kernel: top MLP + all branches, one lane-dense output per tensor.
# ----------------------------------------------------------------------------
def _fused_kernel(n_branches, width0, n_hidden_rest,
                  x_ref, wtop_ref, btop_ref, w0_ref, b0_ref, *refs):
    """refs = (per-branch [w, b] pairs for hidden layers 1.. and output layer,
               branched_out_ref, top_out_ref)."""
    branched_ref, top_ref = refs[-2], refs[-1]
    wb = refs[:-2]

    mxu_dtype = wtop_ref.dtype           # f32 or bf16 MXU operands
    x = x_ref[...]

    # --- top MLP, algebraically collapsed to a single matmul (exact) --------
    top = (jnp.dot(x.astype(mxu_dtype), wtop_ref[...],
                   preferred_element_type=jnp.float32) + btop_ref[...])
    top_ref[...] = top.astype(top_ref.dtype)

    # --- shared leading ReLU + merged first branch layer across branches ----
    x_relu = jnp.maximum(x, 0.0).astype(mxu_dtype)
    h0_all = jnp.maximum(
        jnp.dot(x_relu, w0_ref[...], preferred_element_type=jnp.float32)
        + b0_ref[...],
        0.0,
    )

    # --- per-branch tails (unrolled; all weights already VMEM-resident) -----
    outs = []
    idx = 0
    for bi in range(n_branches):
        h = h0_all[:, bi * width0:(bi + 1) * width0]      # static lane slice
        for _ in range(n_hidden_rest):
            w = wb[idx][...]
            b = wb[idx + 1][...]
            idx += 2
            h = jnp.maximum(
                jnp.dot(h.astype(mxu_dtype), w,
                        preferred_element_type=jnp.float32) + b,
                0.0,
            )
        w = wb[idx][...]
        b = wb[idx + 1][...]
        idx += 2
        o = (jnp.dot(h.astype(mxu_dtype), w,
                     preferred_element_type=jnp.float32)
             + b
             + top[:, bi:bi + 1])        # residual add of the branch's top logit
        outs.append(o)

    # One lane-dense store instead of N tiny masked stores + host concat.
    branched_ref[...] = jnp.concatenate(outs, axis=1).astype(branched_ref.dtype)


# ----------------------------------------------------------------------------
# Module wrapper
# ----------------------------------------------------------------------------
class BranchedResnetEndPallas:
    def __init__(self, categories, in_features, latent=3,
                 fc_layers=(512, 256, 128, 56), param_dtype=jnp.float32,
                 key=jax.random.PRNGKey(0)):
        fc_layers = tuple(fc_layers)
        assert len(fc_layers) >= 1, "fc_layers must contain at least one width"
        self.categories = categories
        self.in_features = in_features
        self.latent = latent
        self.fc_layers = fc_layers
        self.param_dtype = param_dtype
        self.top_classes = len(categories)
        self.n_branches = len(categories)
        self.branch_out_dims = [len(v) for v in categories.values()]
        self.total_out = sum(self.branch_out_dims)

        def init_linear(k, fan_in, fan_out):
            kw, kb = jax.random.split(k)
            # PyTorch weight shape is (out, in); we store (in, out) for x @ W.
            w = (jax.random.normal(kw, (fan_out, fan_in), dtype=jnp.float32) * 0.05).T
            b = (jax.random.normal(kb, (fan_out,), dtype=jnp.float32) * 0.05
                 ).reshape(1, fan_out)
            return w, b

        keys = jax.random.split(key, 2 + self.n_branches)

        # self.fc: Dropout(0.25) -> Linear(in, latent) -> Linear(latent, top)
        fc_w1, fc_b1 = init_linear(keys[0], in_features, latent)
        fc_w2, fc_b2 = init_linear(keys[1], latent, self.top_classes)
        self._ref_fc = (fc_w1, fc_b1, fc_w2, fc_b2)
        # Collapse the two Linears (no nonlinearity in between) -> one matmul.
        self.w_top = (fc_w1 @ fc_w2).astype(param_dtype)
        self.b_top = (fc_b1 @ fc_w2 + fc_b2).astype(jnp.float32)

        # Nested branches (make_fc_layer).
        self._ref_branches = []
        w0_list, b0_list, rest = [], [], []
        for bi, values in enumerate(categories.values()):
            bkeys = jax.random.split(keys[2 + bi], len(fc_layers) + 1)
            ref_params = []
            hidden = []
            last = in_features
            for li, width in enumerate(fc_layers):
                w, b = init_linear(bkeys[li], last, width)
                ref_params += [w, b]
                hidden.append((w, b))
                last = width
            w_out, b_out = init_linear(bkeys[-1], last, len(values))
            ref_params += [w_out, b_out]
            self._ref_branches.append(tuple(ref_params))

            # Merged first layer across branches.
            w0_list.append(hidden[0][0])
            b0_list.append(hidden[0][1])
            # Remaining hidden layers + output layer (branch-major flat order).
            for (w, b) in hidden[1:]:
                rest += [w.astype(param_dtype), b.astype(jnp.float32)]
            rest += [w_out.astype(param_dtype), b_out.astype(jnp.float32)]

        self.w0_all = jnp.concatenate(w0_list, axis=1).astype(param_dtype)
        self.b0_all = jnp.concatenate(b0_list, axis=1).astype(jnp.float32)
        self.rest_params = tuple(rest)

    def __call__(self, x):
        B = x.shape[0]
        # Batch tiling: single block when small; >=512-row tiles when large so
        # the 0.35 us/step overhead amortizes and weights stay resident
        # (constant index_map -> no re-DMA across batch tiles).
        block_b = B if B <= 512 else 512
        grid = (pl.cdiv(B, block_b),)

        def row_spec(cols):
            return pl.BlockSpec((block_b, cols), lambda i: (i, 0))

        def whole_spec(arr):
            return pl.BlockSpec(arr.shape, lambda i: (0, 0))

        params = [self.w_top, self.b_top, self.w0_all, self.b0_all,
                  *self.rest_params]
        in_specs = [row_spec(self.in_features)] + [whole_spec(p) for p in params]
        out_specs = (row_spec(self.total_out), row_spec(self.top_classes))
        out_shape = (
            jax.ShapeDtypeStruct((B, self.total_out), jnp.float32),
            jax.ShapeDtypeStruct((B, self.top_classes), jnp.float32),
        )

        kernel = functools.partial(
            _fused_kernel, self.n_branches, self.fc_layers[0],
            len(self.fc_layers) - 1)

        branched, top = pl.pallas_call(
            kernel,
            grid=grid,
            in_specs=in_specs,
            out_specs=out_specs,
            out_shape=out_shape,
            compiler_params=pltpu.CompilerParams(
                dimension_semantics=("parallel",)),
        )(x, *params)
        return branched, top

    # Pure-JAX reference of the ORIGINAL (un-collapsed, per-branch) math.
    def reference(self, x):
        fc_w1, fc_b1, fc_w2, fc_b2 = self._ref_fc
        top = (x @ fc_w1 + fc_b1) @ fc_w2 + fc_b2
        outs = []
        for i, params in enumerate(self._ref_branches):
            h = jnp.maximum(x, 0.0)
            n_linear = len(params) // 2
            for li in range(n_linear - 1):
                h = jnp.maximum(h @ params[2 * li] + params[2 * li + 1], 0.0)
            o = h @ params[-2] + params[-1] + top[:, i:i + 1]
            outs.append(o)
        return jnp.concatenate(outs, axis=1), top


# ----------------------------------------------------------------------------
# Main
# ----------------------------------------------------------------------------
if __name__ == "__main__":
    key = jax.random.PRNGKey(0)
    k_param, k_x = jax.random.split(key)

    categories = {
        "animal": list(range(4)),
        "vehicle": list(range(5)),
        "plant": list(range(3)),
    }
    batch = 8
    in_features = 32
    latent = 3
    fc_layers = (32, 16)

    model = BranchedResnetEndPallas(
        categories, in_features, latent=latent, fc_layers=fc_layers,
        param_dtype=jnp.float32, key=k_param)

    x = jax.random.normal(k_x, (batch, in_features), dtype=jnp.float32)

    branched, top = model(x)
    jax.block_until_ready(branched)
    jax.block_until_ready(top)

    ref_branched, ref_top = model.reference(x)
    np.testing.assert_allclose(np.asarray(branched), np.asarray(ref_branched),
                               rtol=1e-3, atol=1e-3)
    np.testing.assert_allclose(np.asarray(top), np.asarray(ref_top),
                               rtol=1e-3, atol=1e-3)

    # bf16 MXU-operand path (the recommended setting on v6e/v7x); accumulation,
    # biases and ReLU stay f32, so it is also safe on v5e's f32-only VPU.
    model_bf16 = BranchedResnetEndPallas(
        categories, in_features, latent=latent, fc_layers=fc_layers,
        param_dtype=jnp.bfloat16, key=k_param)
    branched_b, top_b = model_bf16(x)
    jax.block_until_ready(branched_b)
    jax.block_until_ready(top_b)
    np.testing.assert_allclose(np.asarray(branched_b), np.asarray(ref_branched),
                               rtol=5e-2, atol=5e-2)
    np.testing.assert_allclose(np.asarray(top_b), np.asarray(ref_top),
                               rtol=5e-2, atol=5e-2)

    expected_cols = sum(len(v) for v in categories.values())
    assert branched.shape == (batch, expected_cols)
    assert top.shape == (batch, len(categories))

    print("KERNEL_OK")
</pallas_src>

<mosaic_0001>
module attributes {stable_mosaic.version = 11 : i64} {
  func.func @_fused_kernel(%arg0: i32, %arg1: memref<8x32xf32, #tpu.memory_space<vmem>>, %arg2: memref<32x3xf32, #tpu.memory_space<vmem>>, %arg3: memref<1x3xf32, #tpu.memory_space<vmem>>, %arg4: memref<32x96xf32, #tpu.memory_space<vmem>>, %arg5: memref<1x96xf32, #tpu.memory_space<vmem>>, %arg6: memref<32x16xf32, #tpu.memory_space<vmem>>, %arg7: memref<1x16xf32, #tpu.memory_space<vmem>>, %arg8: memref<16x4xf32, #tpu.memory_space<vmem>>, %arg9: memref<1x4xf32, #tpu.memory_space<vmem>>, %arg10: memref<32x16xf32, #tpu.memory_space<vmem>>, %arg11: memref<1x16xf32, #tpu.memory_space<vmem>>, %arg12: memref<16x5xf32, #tpu.memory_space<vmem>>, %arg13: memref<1x5xf32, #tpu.memory_space<vmem>>, %arg14: memref<32x16xf32, #tpu.memory_space<vmem>>, %arg15: memref<1x16xf32, #tpu.memory_space<vmem>>, %arg16: memref<16x3xf32, #tpu.memory_space<vmem>>, %arg17: memref<1x3xf32, #tpu.memory_space<vmem>>, %arg18: memref<8x12xf32, #tpu.memory_space<vmem>>, %arg19: memref<8x3xf32, #tpu.memory_space<vmem>>) attributes {dimension_semantics = [#tpu.dimension_semantics<parallel>], iteration_bounds = array<i64: 1>, scalar_prefetch = 0 : i64, scratch_operands = 0 : i64, tpu.core_type = #tpu.core_type<tc>, window_params = [{transform_indices = @transform_0, window_bounds = array<i64: 8, 32>}, {pipeline_mode = #tpu.pipeline_mode<synchronous>, transform_indices = @transform_1, window_bounds = array<i64: 32, 3>}, {pipeline_mode = #tpu.pipeline_mode<synchronous>, transform_indices = @transform_2, window_bounds = array<i64: 1, 3>}, {pipeline_mode = #tpu.pipeline_mode<synchronous>, transform_indices = @transform_3, window_bounds = array<i64: 32, 96>}, {pipeline_mode = #tpu.pipeline_mode<synchronous>, transform_indices = @transform_4, window_bounds = array<i64: 1, 96>}, {pipeline_mode = #tpu.pipeline_mode<synchronous>, transform_indices = @transform_5, window_bounds = array<i64: 32, 16>}, {pipeline_mode = #tpu.pipeline_mode<synchronous>, transform_indices = @transform_6, window_bounds = array<i64: 1, 16>}, {pipeline_mode = #tpu.pipeline_mode<synchronous>, transform_indices = @transform_7, window_bounds = array<i64: 16, 4>}, {pipeline_mode = #tpu.pipeline_mode<synchronous>, transform_indices = @transform_8, window_bounds = array<i64: 1, 4>}, {pipeline_mode = #tpu.pipeline_mode<synchronous>, transform_indices = @transform_9, window_bounds = array<i64: 32, 16>}, {pipeline_mode = #tpu.pipeline_mode<synchronous>, transform_indices = @transform_10, window_bounds = array<i64: 1, 16>}, {pipeline_mode = #tpu.pipeline_mode<synchronous>, transform_indices = @transform_11, window_bounds = array<i64: 16, 5>}, {pipeline_mode = #tpu.pipeline_mode<synchronous>, transform_indices = @transform_12, window_bounds = array<i64: 1, 5>}, {pipeline_mode = #tpu.pipeline_mode<synchronous>, transform_indices = @transform_13, window_bounds = array<i64: 32, 16>}, {pipeline_mode = #tpu.pipeline_mode<synchronous>, transform_indices = @transform_14, window_bounds = array<i64: 1, 16>}, {pipeline_mode = #tpu.pipeline_mode<synchronous>, transform_indices = @transform_15, window_bounds = array<i64: 16, 3>}, {pipeline_mode = #tpu.pipeline_mode<synchronous>, transform_indices = @transform_16, window_bounds = array<i64: 1, 3>}, {transform_indices = @transform_17, window_bounds = array<i64: 8, 12>}, {transform_indices = @transform_18, window_bounds = array<i64: 8, 3>}]} {
    %c0 = arith.constant 0 : index
    %c0_0 = arith.constant 0 : index
    %0 = vector.load %arg1[%c0, %c0_0] : memref<8x32xf32, #tpu.memory_space<vmem>>, vector<8x32xf32>
    %c0_1 = arith.constant 0 : index
    %c0_2 = arith.constant 0 : index
    %1 = vector.load %arg2[%c0_1, %c0_2] : memref<32x3xf32, #tpu.memory_space<vmem>>, vector<32x3xf32>
    %cst = arith.constant dense<0.000000e+00> : vector<8x3xf32>
    %2 = tpu.matmul %0, %1, %cst {dimension_numbers = #tpu.dot_dimension_numbers<[1], [0], [0], [1], [0, 0, 1, 1], [], []>} : vector<8x32xf32>, vector<32x3xf32>, vector<8x3xf32> -> vector<8x3xf32>
    %c0_3 = arith.constant 0 : index
    %c0_4 = arith.constant 0 : index
    %3 = vector.load %arg3[%c0_3, %c0_4] : memref<1x3xf32, #tpu.memory_space<vmem>>, vector<1x3xf32>
    %4 = vector.broadcast %3 : vector<1x3xf32> to vector<8x3xf32>
    %5 = arith.addf %2, %4 : vector<8x3xf32>
    %c0_5 = arith.constant 0 : index
    %c0_6 = arith.constant 0 : index
    %6 = vector.load %arg19[%c0_5, %c0_6] : memref<8x3xf32, #tpu.memory_space<vmem>>, vector<8x3xf32>
    tpu.vector_store %arg19[%c0_5, %c0_6], %5 {strides = array<i32>} : memref<8x3xf32, #tpu.memory_space<vmem>>, vector<8x3xf32>,
    %cst_7 = arith.constant 0.000000e+00 : f32
    %7 = vector.broadcast %cst_7 : f32 to vector<8x32xf32>
    %8 = arith.maximumf %0, %7 : vector<8x32xf32>
    %c0_8 = arith.constant 0 : index
    %c0_9 = arith.constant 0 : index
    %9 = vector.load %arg4[%c0_8, %c0_9] : memref<32x96xf32, #tpu.memory_space<vmem>>, vector<32x96xf32>
    %cst_10 = arith.constant dense<0.000000e+00> : vector<8x96xf32>
    %10 = tpu.matmul %8, %9, %cst_10 {dimension_numbers = #tpu.dot_dimension_numbers<[1], [0], [0], [1], [0, 0, 1, 1], [], []>} : vector<8x32xf32>, vector<32x96xf32>, vector<8x96xf32> -> vector<8x96xf32>
    %c0_11 = arith.constant 0 : index
    %c0_12 = arith.constant 0 : index
    %11 = vector.load %arg5[%c0_11, %c0_12] : memref<1x96xf32, #tpu.memory_space<vmem>>, vector<1x96xf32>
    %12 = vector.broadcast %11 : vector<1x96xf32> to vector<8x96xf32>
    %13 = arith.addf %10, %12 : vector<8x96xf32>
    %cst_13 = arith.constant 0.000000e+00 : f32
    %14 = vector.broadcast %cst_13 : f32 to vector<8x96xf32>
    %15 = arith.maximumf %13, %14 : vector<8x96xf32>
    %16 = vector.extract_strided_slice %15 {offsets = [0, 0], sizes = [8, 32], strides = [1, 1]} : vector<8x96xf32> to vector<8x32xf32>
    %c0_14 = arith.constant 0 : index
    %c0_15 = arith.constant 0 : index
    %17 = vector.load %arg6[%c0_14, %c0_15] : memref<32x16xf32, #tpu.memory_space<vmem>>, vector<32x16xf32>
    %c0_16 = arith.constant 0 : index
    %c0_17 = arith.constant 0 : index
    %18 = vector.load %arg7[%c0_16, %c0_17] : memref<1x16xf32, #tpu.memory_space<vmem>>, vector<1x16xf32>
    %cst_18 = arith.constant dense<0.000000e+00> : vector<8x16xf32>
    %19 = tpu.matmul %16, %17, %cst_18 {dimension_numbers = #tpu.dot_dimension_numbers<[1], [0], [0], [1], [0, 0, 1, 1], [], []>} : vector<8x32xf32>, vector<32x16xf32>, vector<8x16xf32> -> vector<8x16xf32>
    %20 = vector.broadcast %18 : vector<1x16xf32> to vector<8x16xf32>
    %21 = arith.addf %19, %20 : vector<8x16xf32>
    %cst_19 = arith.constant 0.000000e+00 : f32
    %22 = vector.broadcast %cst_19 : f32 to vector<8x16xf32>
    %23 = arith.maximumf %21, %22 : vector<8x16xf32>
    %c0_20 = arith.constant 0 : index
    %c0_21 = arith.constant 0 : index
    %24 = vector.load %arg8[%c0_20, %c0_21] : memref<16x4xf32, #tpu.memory_space<vmem>>, vector<16x4xf32>
    %c0_22 = arith.constant 0 : index
    %c0_23 = arith.constant 0 : index
    %25 = vector.load %arg9[%c0_22, %c0_23] : memref<1x4xf32, #tpu.memory_space<vmem>>, vector<1x4xf32>
    %cst_24 = arith.constant dense<0.000000e+00> : vector<8x4xf32>
    %26 = tpu.matmul %23, %24, %cst_24 {dimension_numbers = #tpu.dot_dimension_numbers<[1], [0], [0], [1], [0, 0, 1, 1], [], []>} : vector<8x16xf32>, vector<16x4xf32>, vector<8x4xf32> -> vector<8x4xf32>
    %27 = vector.broadcast %25 : vector<1x4xf32> to vector<8x4xf32>
    %28 = arith.addf %26, %27 : vector<8x4xf32>
    %29 = vector.extract_strided_slice %5 {offsets = [0, 0], sizes = [8, 1], strides = [1, 1]} : vector<8x3xf32> to vector<8x1xf32>
    %30 = vector.broadcast %29 : vector<8x1xf32> to vector<8x4xf32>
    %31 = arith.addf %28, %30 : vector<8x4xf32>
    %32 = vector.extract_strided_slice %15 {offsets = [0, 32], sizes = [8, 32], strides = [1, 1]} : vector<8x96xf32> to vector<8x32xf32>
    %c0_25 = arith.constant 0 : index
    %c0_26 = arith.constant 0 : index
    %33 = vector.load %arg10[%c0_25, %c0_26] : memref<32x16xf32, #tpu.memory_space<vmem>>, vector<32x16xf32>
    %c0_27 = arith.constant 0 : index
    %c0_28 = arith.constant 0 : index
    %34 = vector.load %arg11[%c0_27, %c0_28] : memref<1x16xf32, #tpu.memory_space<vmem>>, vector<1x16xf32>
    %cst_29 = arith.constant dense<0.000000e+00> : vector<8x16xf32>
    %35 = tpu.matmul %32, %33, %cst_29 {dimension_numbers = #tpu.dot_dimension_numbers<[1], [0], [0], [1], [0, 0, 1, 1], [], []>} : vector<8x32xf32>, vector<32x16xf32>, vector<8x16xf32> -> vector<8x16xf32>
    %36 = vector.broadcast %34 : vector<1x16xf32> to vector<8x16xf32>
    %37 = arith.addf %35, %36 : vector<8x16xf32>
    %cst_30 = arith.constant 0.000000e+00 : f32
    %38 = vector.broadcast %cst_30 : f32 to vector<8x16xf32>
    %39 = arith.maximumf %37, %38 : vector<8x16xf32>
    %c0_31 = arith.constant 0 : index
    %c0_32 = arith.constant 0 : index
    %40 = vector.load %arg12[%c0_31, %c0_32] : memref<16x5xf32, #tpu.memory_space<vmem>>, vector<16x5xf32>
    %c0_33 = arith.constant 0 : index
    %c0_34 = arith.constant 0 : index
    %41 = vector.load %arg13[%c0_33, %c0_34] : memref<1x5xf32, #tpu.memory_space<vmem>>, vector<1x5xf32>
    %cst_35 = arith.constant dense<0.000000e+00> : vector<8x5xf32>
    %42 = tpu.matmul %39, %40, %cst_35 {dimension_numbers = #tpu.dot_dimension_numbers<[1], [0], [0], [1], [0, 0, 1, 1], [], []>} : vector<8x16xf32>, vector<16x5xf32>, vector<8x5xf32> -> vector<8x5xf32>
    %43 = vector.broadcast %41 : vector<1x5xf32> to vector<8x5xf32>
    %44 = arith.addf %42, %43 : vector<8x5xf32>
    %45 = vector.extract_strided_slice %5 {offsets = [0, 1], sizes = [8, 1], strides = [1, 1]} : vector<8x3xf32> to vector<8x1xf32>
    %46 = vector.broadcast %45 : vector<8x1xf32> to vector<8x5xf32>
    %47 = arith.addf %44, %46 : vector<8x5xf32>
    %48 = vector.extract_strided_slice %15 {offsets = [0, 64], sizes = [8, 32], strides = [1, 1]} : vector<8x96xf32> to vector<8x32xf32>
    %c0_36 = arith.constant 0 : index
    %c0_37 = arith.constant 0 : index
    %49 = vector.load %arg14[%c0_36, %c0_37] : memref<32x16xf32, #tpu.memory_space<vmem>>, vector<32x16xf32>
    %c0_38 = arith.constant 0 : index
    %c0_39 = arith.constant 0 : index
    %50 = vector.load %arg15[%c0_38, %c0_39] : memref<1x16xf32, #tpu.memory_space<vmem>>, vector<1x16xf32>
    %cst_40 = arith.constant dense<0.000000e+00> : vector<8x16xf32>
    %51 = tpu.matmul %48, %49, %cst_40 {dimension_numbers = #tpu.dot_dimension_numbers<[1], [0], [0], [1], [0, 0, 1, 1], [], []>} : vector<8x32xf32>, vector<32x16xf32>, vector<8x16xf32> -> vector<8x16xf32>
    %52 = vector.broadcast %50 : vector<1x16xf32> to vector<8x16xf32>
    %53 = arith.addf %51, %52 : vector<8x16xf32>
    %cst_41 = arith.constant 0.000000e+00 : f32
    %54 = vector.broadcast %cst_41 : f32 to vector<8x16xf32>
    %55 = arith.maximumf %53, %54 : vector<8x16xf32>
    %c0_42 = arith.constant 0 : index
    %c0_43 = arith.constant 0 : index
    %56 = vector.load %arg16[%c0_42, %c0_43] : memref<16x3xf32, #tpu.memory_space<vmem>>, vector<16x3xf32>
    %c0_44 = arith.constant 0 : index
    %c0_45 = arith.constant 0 : index
    %57 = vector.load %arg17[%c0_44, %c0_45] : memref<1x3xf32, #tpu.memory_space<vmem>>, vector<1x3xf32>
    %cst_46 = arith.constant dense<0.000000e+00> : vector<8x3xf32>
    %58 = tpu.matmul %55, %56, %cst_46 {dimension_numbers = #tpu.dot_dimension_numbers<[1], [0], [0], [1], [0, 0, 1, 1], [], []>} : vector<8x16xf32>, vector<16x3xf32>, vector<8x3xf32> -> vector<8x3xf32>
    %59 = vector.broadcast %57 : vector<1x3xf32> to vector<8x3xf32>
    %60 = arith.addf %58, %59 : vector<8x3xf32>
    %61 = vector.extract_strided_slice %5 {offsets = [0, 2], sizes = [8, 1], strides = [1, 1]} : vector<8x3xf32> to vector<8x1xf32>
    %62 = vector.broadcast %61 : vector<8x1xf32> to vector<8x3xf32>
    %63 = arith.addf %60, %62 : vector<8x3xf32>
    %64 = tpu.concatenate %31, %47, %63 in 1 : vector<8x4xf32>, vector<8x5xf32>, vector<8x3xf32> -> vector<8x12xf32>
    %c0_47 = arith.constant 0 : index
    %c0_48 = arith.constant 0 : index
    %65 = vector.load %arg18[%c0_47, %c0_48] : memref<8x12xf32, #tpu.memory_space<vmem>>, vector<8x12xf32>
    tpu.vector_store %arg18[%c0_47, %c0_48], %64 {strides = array<i32>} : memref<8x12xf32, #tpu.memory_space<vmem>>, vector<8x12xf32>,
    return
  }
  func.func @transform_0(%arg0: i32) -> (i32, i32) {
    %c0_i32 = arith.constant 0 : i32
    %c0_i32_0 = arith.constant 0 : i32
    return %arg0, %c0_i32 : i32, i32
  }
  func.func @transform_1(%arg0: i32) -> (i32, i32) {
    %c0_i32 = arith.constant 0 : i32
    %c0_i32_0 = arith.constant 0 : i32
    %c0_i32_1 = arith.constant 0 : i32
    return %c0_i32, %c0_i32_0 : i32, i32
  }
  func.func @transform_2(%arg0: i32) -> (i32, i32) {
    %c0_i32 = arith.constant 0 : i32
    %c0_i32_0 = arith.constant 0 : i32
    %c0_i32_1 = arith.constant 0 : i32
    return %c0_i32, %c0_i32_0 : i32, i32
  }
  func.func @transform_3(%arg0: i32) -> (i32, i32) {
    %c0_i32 = arith.constant 0 : i32
    %c0_i32_0 = arith.constant 0 : i32
    %c0_i32_1 = arith.constant 0 : i32
    return %c0_i32, %c0_i32_0 : i32, i32
  }
  func.func @transform_4(%arg0: i32) -> (i32, i32) {
    %c0_i32 = arith.constant 0 : i32
    %c0_i32_0 = arith.constant 0 : i32
    %c0_i32_1 = arith.constant 0 : i32
    return %c0_i32, %c0_i32_0 : i32, i32
  }
  func.func @transform_5(%arg0: i32) -> (i32, i32) {
    %c0_i32 = arith.constant 0 : i32
    %c0_i32_0 = arith.constant 0 : i32
    %c0_i32_1 = arith.constant 0 : i32
    return %c0_i32, %c0_i32_0 : i32, i32
  }
  func.func @transform_6(%arg0: i32) -> (i32, i32) {
    %c0_i32 = arith.constant 0 : i32
    %c0_i32_0 = arith.constant 0 : i32
    %c0_i32_1 = arith.constant 0 : i32
    return %c0_i32, %c0_i32_0 : i32, i32
  }
  func.func @transform_7(%arg0: i32) -> (i32, i32) {
    %c0_i32 = arith.constant 0 : i32
    %c0_i32_0 = arith.constant 0 : i32
    %c0_i32_1 = arith.constant 0 : i32
    return %c0_i32, %c0_i32_0 : i32, i32
  }
  func.func @transform_8(%arg0: i32) -> (i32, i32) {
    %c0_i32 = arith.constant 0 : i32
    %c0_i32_0 = arith.constant 0 : i32
    %c0_i32_1 = arith.constant 0 : i32
    return %c0_i32, %c0_i32_0 : i32, i32
  }
  func.func @transform_9(%arg0: i32) -> (i32, i32) {
    %c0_i32 = arith.constant 0 : i32
    %c0_i32_0 = arith.constant 0 : i32
    %c0_i32_1 = arith.constant 0 : i32
    return %c0_i32, %c0_i32_0 : i32, i32
  }
  func.func @transform_10(%arg0: i32) -> (i32, i32) {
    %c0_i32 = arith.constant 0 : i32
    %c0_i32_0 = arith.constant 0 : i32
    %c0_i32_1 = arith.constant 0 : i32
    return %c0_i32, %c0_i32_0 : i32, i32
  }
  func.func @transform_11(%arg0: i32) -> (i32, i32) {
    %c0_i32 = arith.constant 0 : i32
    %c0_i32_0 = arith.constant 0 : i32
    %c0_i32_1 = arith.constant 0 : i32
    return %c0_i32, %c0_i32_0 : i32, i32
  }
  func.func @transform_12(%arg0: i32) -> (i32, i32) {
    %c0_i32 = arith.constant 0 : i32
    %c0_i32_0 = arith.constant 0 : i32
    %c0_i32_1 = arith.constant 0 : i32
    return %c0_i32, %c0_i32_0 : i32, i32
  }
  func.func @transform_13(%arg0: i32) -> (i32, i32) {
    %c0_i32 = arith.constant 0 : i32
    %c0_i32_0 = arith.constant 0 : i32
    %c0_i32_1 = arith.constant 0 : i32
    return %c0_i32, %c0_i32_0 : i32, i32
  }
  func.func @transform_14(%arg0: i32) -> (i32, i32) {
    %c0_i32 = arith.constant 0 : i32
    %c0_i32_0 = arith.constant 0 : i32
    %c0_i32_1 = arith.constant 0 : i32
    return %c0_i32, %c0_i32_0 : i32, i32
  }
  func.func @transform_15(%arg0: i32) -> (i32, i32) {
    %c0_i32 = arith.constant 0 : i32
    %c0_i32_0 = arith.constant 0 : i32
    %c0_i32_1 = arith.constant 0 : i32
    return %c0_i32, %c0_i32_0 : i32, i32
  }
  func.func @transform_16(%arg0: i32) -> (i32, i32) {
    %c0_i32 = arith.constant 0 : i32
    %c0_i32_0 = arith.constant 0 : i32
    %c0_i32_1 = arith.constant 0 : i32
    return %c0_i32, %c0_i32_0 : i32, i32
  }
  func.func @transform_17(%arg0: i32) -> (i32, i32) {
    %c0_i32 = arith.constant 0 : i32
    %c0_i32_0 = arith.constant 0 : i32
    return %arg0, %c0_i32 : i32, i32
  }
  func.func @transform_18(%arg0: i32) -> (i32, i32) {
    %c0_i32 = arith.constant 0 : i32
    %c0_i32_0 = arith.constant 0 : i32
    return %arg0, %c0_i32 : i32, i32
  }
}

</mosaic_0001>

<llo_original>
// kernel: tpu_custom_call.1
$region0: #{tpu_custom_call.1}
  #allocation0 [shape = 'u32[]', space=smem, size = 0x4, offset = 0x4, fixed_abs, tag = 'smem constant byte address 0x4 - core index']
  #allocation1 [shape = 'u32[72,128]{1,0:T(1,128)}', space=vmem, size = 0x9000, scoped, tag = 'internal scratch']
  %s0 = inlined_call_operand.vmem [shape: f32[8,32], index: 0, kind: input, shape index: {}]
  %s1 = inlined_call_operand.vmem [shape: f32[32,3], index: 1, kind: input, shape index: {}]
  %s2 = inlined_call_operand.vmem [shape: f32[1,3], index: 2, kind: input, shape index: {}]
  %s3 = inlined_call_operand.vmem [shape: f32[32,96], index: 3, kind: input, shape index: {}]
  %s4 = inlined_call_operand.vmem [shape: f32[1,96], index: 4, kind: input, shape index: {}]
  %s5 = inlined_call_operand.vmem [shape: f32[32,16], index: 5, kind: input, shape index: {}]
  %s6 = inlined_call_operand.vmem [shape: f32[1,16], index: 6, kind: input, shape index: {}]
  %s7 = inlined_call_operand.vmem [shape: f32[16,4], index: 7, kind: input, shape index: {}]
  %s8 = inlined_call_operand.vmem [shape: f32[1,4], index: 8, kind: input, shape index: {}]
  %s9 = inlined_call_operand.vmem [shape: f32[32,16], index: 9, kind: input, shape index: {}]
  %s10 = inlined_call_operand.vmem [shape: f32[1,16], index: 10, kind: input, shape index: {}]
  %s11 = inlined_call_operand.vmem [shape: f32[16,5], index: 11, kind: input, shape index: {}]
  %s12 = inlined_call_operand.vmem [shape: f32[1,5], index: 12, kind: input, shape index: {}]
  %s13 = inlined_call_operand.vmem [shape: f32[32,16], index: 13, kind: input, shape index: {}]
  %s14 = inlined_call_operand.vmem [shape: f32[1,16], index: 14, kind: input, shape index: {}]
  %s15 = inlined_call_operand.vmem [shape: f32[16,3], index: 15, kind: input, shape index: {}]
  %s16 = inlined_call_operand.vmem [shape: f32[1,3], index: 16, kind: input, shape index: {}]
  %s17 = inlined_call_operand.hbm [shape: f32[8,12], index: 17, kind: output, shape index: {0}]
  %s18 = inlined_call_operand.vmem [shape: f32[8,3], index: 18, kind: output, shape index: {1}]
  %19 = xla_tuple %s17, %s18
  %s20 = sld [smem:[#allocation0]]
  $region86: #{tpu_custom_call.1} parent=0
    _
  %s22 = ssub.s32 1, %s20
  %s23 = scalar_select 0, %s22, %s20
  $region1: #{tpu_custom_call.1} parent=0
    #allocation2 [shape = 'u8[4096]{0}', space=vmem, size = 0x1000, scoped, tag = 'output window, operand 0, single buffered']
    #allocation3 [shape = 's32[1]{0}', space=sflag, size = 0x4, scoped, tag = 'scoped memory for tpu_custom_call.1']
    %24 = vsyncpa [#allocation3], 0
    // Predicated region
    $region2: #{tpu_custom_call.1} parent=1 // pred_check
      _
    $region3: #{tpu_custom_call.1} parent=1 // pred_check_branch
      %26 = sbr.rel (0) target = $region5
    $region4: #{tpu_custom_call.1} parent=1 // pred_region
      _
    $region5: #{tpu_custom_call.1} parent=1 // pred_fallthru
      _
    // Predicated region
    $region6: #{tpu_custom_call.1} parent=1 // pred_check
      _
    $region7: #{tpu_custom_call.1} parent=1 // pred_check_branch
      %28 = sbr.rel (0) target = $region9
    $region8: #{tpu_custom_call.1} parent=1 // pred_region
      _
    $region9: #{tpu_custom_call.1} parent=1 // pred_fallthru
      _
    // Predicated region
    $region10: #{tpu_custom_call.1} parent=1 // pred_check
      _
    $region11: #{tpu_custom_call.1} parent=1 // pred_check_branch
      %30 = sbr.rel (0) target = $region13
    $region12: #{tpu_custom_call.1} parent=1 // pred_region
      _
    $region13: #{tpu_custom_call.1} parent=1 // pred_fallthru
      _
    // Predicated region
    $region14: #{tpu_custom_call.1} parent=1 // pred_check
      _
    $region15: #{tpu_custom_call.1} parent=1 // pred_check_branch
      %32 = sbr.rel (0) target = $region17
    $region16: #{tpu_custom_call.1} parent=1 // pred_region
      _
    $region17: #{tpu_custom_call.1} parent=1 // pred_fallthru
      _
    // Predicated region
    $region18: #{tpu_custom_call.1} parent=1 // pred_check
      _
    $region19: #{tpu_custom_call.1} parent=1 // pred_check_branch
      %34 = sbr.rel (0) target = $region21
    $region20: #{tpu_custom_call.1} parent=1 // pred_region
      _
    $region21: #{tpu_custom_call.1} parent=1 // pred_fallthru
      _
    // Predicated region
    $region22: #{tpu_custom_call.1} parent=1 // pred_check
      _
    $region23: #{tpu_custom_call.1} parent=1 // pred_check_branch
      %36 = sbr.rel (0) target = $region25
    $region24: #{tpu_custom_call.1} parent=1 // pred_region
      _
    $region25: #{tpu_custom_call.1} parent=1 // pred_fallthru
      _
    // Predicated region
    $region26: #{tpu_custom_call.1} parent=1 // pred_check
      _
    $region27: #{tpu_custom_call.1} parent=1 // pred_check_branch
      %38 = sbr.rel (0) target = $region29
    $region28: #{tpu_custom_call.1} parent=1 // pred_region
      _
    $region29: #{tpu_custom_call.1} parent=1 // pred_fallthru
      _
    // Predicated region
    $region30: #{tpu_custom_call.1} parent=1 // pred_check
      _
    $region31: #{tpu_custom_call.1} parent=1 // pred_check_branch
      %40 = sbr.rel (0) target = $region33
    $region32: #{tpu_custom_call.1} parent=1 // pred_region
      _
    $region33: #{tpu_custom_call.1} parent=1 // pred_fallthru
      _
    // Predicated region
    $region34: #{tpu_custom_call.1} parent=1 // pred_check
      _
    $region35: #{tpu_custom_call.1} parent=1 // pred_check_branch
      %42 = sbr.rel (0) target = $region37
    $region36: #{tpu_custom_call.1} parent=1 // pred_region
      _
    $region37: #{tpu_custom_call.1} parent=1 // pred_fallthru
      _
    // Predicated region
    $region38: #{tpu_custom_call.1} parent=1 // pred_check
      _
    $region39: #{tpu_custom_call.1} parent=1 // pred_check_branch
      %44 = sbr.rel (0) target = $region41
    $region40: #{tpu_custom_call.1} parent=1 // pred_region
      _
    $region41: #{tpu_custom_call.1} parent=1 // pred_fallthru
      _
    // Predicated region
    $region42: #{tpu_custom_call.1} parent=1 // pred_check
      _
    $region43: #{tpu_custom_call.1} parent=1 // pred_check_branch
      %46 = sbr.rel (0) target = $region45
    $region44: #{tpu_custom_call.1} parent=1 // pred_region
      _
    $region45: #{tpu_custom_call.1} parent=1 // pred_fallthru
      _
    // Predicated region
    $region46: #{tpu_custom_call.1} parent=1 // pred_check
      _
    $region47: #{tpu_custom_call.1} parent=1 // pred_check_branch
      %48 = sbr.rel (0) target = $region49
    $region48: #{tpu_custom_call.1} parent=1 // pred_region
      _
    $region49: #{tpu_custom_call.1} parent=1 // pred_fallthru
      _
    // Predicated region
    $region50: #{tpu_custom_call.1} parent=1 // pred_check
      _
    $region51: #{tpu_custom_call.1} parent=1 // pred_check_branch
      %50 = sbr.rel (0) target = $region53
    $region52: #{tpu_custom_call.1} parent=1 // pred_region
      _
    $region53: #{tpu_custom_call.1} parent=1 // pred_fallthru
      _
    // Predicated region
    $region54: #{tpu_custom_call.1} parent=1 // pred_check
      _
    $region55: #{tpu_custom_call.1} parent=1 // pred_check_branch
      %52 = sbr.rel (0) target = $region57
    $region56: #{tpu_custom_call.1} parent=1 // pred_region
      _
    $region57: #{tpu_custom_call.1} parent=1 // pred_fallthru
      _
    // Predicated region
    $region58: #{tpu_custom_call.1} parent=1 // pred_check
      _
    $region59: #{tpu_custom_call.1} parent=1 // pred_check_branch
      %54 = sbr.rel (0) target = $region61
    $region60: #{tpu_custom_call.1} parent=1 // pred_region
      _
    $region61: #{tpu_custom_call.1} parent=1 // pred_fallthru
      _
    // Predicated region
    $region62: #{tpu_custom_call.1} parent=1 // pred_check
      _
    $region63: #{tpu_custom_call.1} parent=1 // pred_check_branch
      %56 = sbr.rel (0) target = $region65
    $region64: #{tpu_custom_call.1} parent=1 // pred_region
      _
    $region65: #{tpu_custom_call.1} parent=1 // pred_fallthru
      _
    // Predicated region
    $region66: #{tpu_custom_call.1} parent=1 // pred_check
      _
    $region67: #{tpu_custom_call.1} parent=1 // pred_check_branch
      %58 = sbr.rel (0) target = $region69
    $region68: #{tpu_custom_call.1} parent=1 // pred_region
      _
    $region69: #{tpu_custom_call.1} parent=1 // pred_fallthru
      _
    %v59 = vld [vmem:[%s0] sm:$0xff]
    %v60 = vld [vmem:[%s1] sm:$0xff]
    %v61 = vld [vmem:[%s1 + $0x8] sm:$0xff]
    %v62 = vld [vmem:[%s1 + $0x10] sm:$0xff]
    %v63 = vld [vmem:[%s1 + $0x18] sm:$0xff]
    %v64 = vld [vmem:[%s2] sm:$0x1]
    %v66 = vperm.slane %v64, 0
    %vm68 = vcmask 261120
    %v70 = vsel %vm68, %v59, 0
    %72 = vmatpush.msra.mxu0 0.0
    %73 = vmatpush.msra.mxu0 0.0
    %74 = vmatpush.msra.mxu0 0.0
    %75 = vmatpush.msra.mxu0 0.0
    %76 = vmatpush.msra.mxu0 0.0
    %77 = vmatpush.msra.mxu0 0.0
    %78 = vmatpush.msra.mxu0 0.0
    %79 = vmatpush.msra.mxu0 0.0
    %80 = vmatpush.msra.mxu0 0.0
    %81 = vmatpush.msra.mxu0 0.0
    %82 = vmatpush.msra.mxu0 0.0
    %83 = vmatpush.msra.mxu0 0.0
    %84 = vmatpush.msra.mxu0 %v63
    %85 = vmatpush.msra.mxu0 %v62
    %86 = vmatpush.msra.mxu0 %v61
    %87 = vmatpush.msra.mxu0 %v60
    %88 = vmatmul.f32.gmra.mxu0 %v70
    %v89 = vpop.f32.mrf.mxu0
    %v90 = vadd.f32 %v66, %v89
    %91 = vdwg.mxu0
    %vm92 = vcmask 23552
    %93 = vst.msk [vmem:[%s18] sm:$0xff] %vm92, %v90
    %v94 = vmax.f32 %v59, 0.0
    %v95 = vld [vmem:[%s3] sm:$0xff]
    %v96 = vld [vmem:[%s3 + $0x8] sm:$0xff]
    %v97 = vld [vmem:[%s3 + $0x10] sm:$0xff]
    %v98 = vld [vmem:[%s3 + $0x18] sm:$0xff]
    %v99 = vld [vmem:[%s4] sm:$0x1]
    %v101 = vperm.slane %v99, 0
    %v104 = vsel %vm68, %v94, 0
    %106 = vmatpush.msra.mxu0 0.0
    %107 = vmatpush.msra.mxu0 0.0
    %108 = vmatpush.msra.mxu0 0.0
    %109 = vmatpush.msra.mxu0 0.0
    %110 = vmatpush.msra.mxu0 0.0
    %111 = vmatpush.msra.mxu0 0.0
    %112 = vmatpush.msra.mxu0 0.0
    %113 = vmatpush.msra.mxu0 0.0
    %114 = vmatpush.msra.mxu0 0.0
    %115 = vmatpush.msra.mxu0 0.0
    %116 = vmatpush.msra.mxu0 0.0
    %117 = vmatpush.msra.mxu0 0.0
    %118 = vmatpush.msra.mxu0 %v98
    %119 = vmatpush.msra.mxu0 %v97
    %120 = vmatpush.msra.mxu0 %v96
    %121 = vmatpush.msra.mxu0 %v95
    %122 = vmatmul.f32.gmra.mxu0 %v104
    %v123 = vpop.f32.mrf.mxu0
    %v124 = vadd.f32 %v101, %v123
    %125 = vdwg.mxu0
    %v126 = vmax.f32 %v124, 0.0
    %v127 = vld [vmem:[%s5] sm:$0xff]
    %v128 = vld [vmem:[%s5 + $0x8] sm:$0xff]
    %v129 = vld [vmem:[%s5 + $0x10] sm:$0xff]
    %v130 = vld [vmem:[%s5 + $0x18] sm:$0xff]
    %v131 = vld [vmem:[%s6] sm:$0x1]
    %v133 = vperm.slane %v131, 0
    %v136 = vsel %vm68, %v126, 0
    %138 = vmatpush.msra.mxu0 0.0
    %139 = vmatpush.msra.mxu0 0.0
    %140 = vmatpush.msra.mxu0 0.0
    %141 = vmatpush.msra.mxu0 0.0
    %142 = vmatpush.msra.mxu0 0.0
    %143 = vmatpush.msra.mxu0 0.0
    %144 = vmatpush.msra.mxu0 0.0
    %145 = vmatpush.msra.mxu0 0.0
    %146 = vmatpush.msra.mxu0 0.0
    %147 = vmatpush.msra.mxu0 0.0
    %148 = vmatpush.msra.mxu0 0.0
    %149 = vmatpush.msra.mxu0 0.0
    %150 = vmatpush.msra.mxu0 %v130
    %151 = vmatpush.msra.mxu0 %v129
    %152 = vmatpush.msra.mxu0 %v128
    %153 = vmatpush.msra.mxu0 %v127
    %154 = vmatmul.f32.gmra.mxu0 %v136
    %v155 = vpop.f32.mrf.mxu0
    %v156 = vadd.f32 %v133, %v155
    %157 = vdwg.mxu0
    %v158 = vmax.f32 %v156, 0.0
    %v159 = vld [vmem:[%s7] sm:$0xff]
    %v160 = vld [vmem:[%s7 + $0x8] sm:$0xff]
    %v161 = vld [vmem:[%s8] sm:$0x1]
    %v163 = vperm.slane %v161, 0
    %vm165 = vcmask 130048
    %v167 = vsel %vm165, %v158, 0
    %169 = vmatpush.msra.mxu0 0.0
    %170 = vmatpush.msra.mxu0 0.0
    %171 = vmatpush.msra.mxu0 0.0
    %172 = vmatpush.msra.mxu0 0.0
    %173 = vmatpush.msra.mxu0 0.0
    %174 = vmatpush.msra.mxu0 0.0
    %175 = vmatpush.msra.mxu0 0.0
    %176 = vmatpush.msra.mxu0 0.0
    %177 = vmatpush.msra.mxu0 0.0
    %178 = vmatpush.msra.mxu0 0.0
    %179 = vmatpush.msra.mxu0 0.0
    %180 = vmatpush.msra.mxu0 0.0
    %181 = vmatpush.msra.mxu0 0.0
    %182 = vmatpush.msra.mxu0 0.0
    %183 = vmatpush.msra.mxu0 %v160
    %184 = vmatpush.msra.mxu0 %v159
    %185 = vmatmul.f32.gmra.mxu0 %v167
    %v186 = vpop.f32.mrf.mxu0
    %v187 = vadd.f32 %v163, %v186
    %188 = vdwg.mxu0
    %190 = vset.pattern.permute.xlu0 0
    %191 = vperm.xlu0 %190, %v90
    %v192 = vpop.permute.xlu0 %191
    %v194 = vadd.f32 %v187, %v192
    %v195 = vld [vmem:[%s9] sm:$0xff]
    %v196 = vld [vmem:[%s9 + $0x8] sm:$0xff]
    %v197 = vld [vmem:[%s9 + $0x10] sm:$0xff]
    %v198 = vld [vmem:[%s9 + $0x18] sm:$0xff]
    %v199 = vld [vmem:[%s10] sm:$0x1]
    %v201 = vperm.slane %v199, 0
    %203 = vrot.lane.b32.xlu0 %v126, 96
    %v204 = vpop.permute.xlu0 %203
    %v205 = vsel %vm68, %v204, 0
    %207 = vmatpush.msra.mxu0 0.0
    %208 = vmatpush.msra.mxu0 0.0
    %209 = vmatpush.msra.mxu0 0.0
    %210 = vmatpush.msra.mxu0 0.0
    %211 = vmatpush.msra.mxu0 0.0
    %212 = vmatpush.msra.mxu0 0.0
    %213 = vmatpush.msra.mxu0 0.0
    %214 = vmatpush.msra.mxu0 0.0
    %215 = vmatpush.msra.mxu0 0.0
    %216 = vmatpush.msra.mxu0 0.0
    %217 = vmatpush.msra.mxu0 0.0
    %218 = vmatpush.msra.mxu0 0.0
    %219 = vmatpush.msra.mxu0 %v198
    %220 = vmatpush.msra.mxu0 %v197
    %221 = vmatpush.msra.mxu0 %v196
    %222 = vmatpush.msra.mxu0 %v195
    %223 = vmatmul.f32.gmra.mxu0 %v205
    %v224 = vpop.f32.mrf.mxu0
    %v225 = vadd.f32 %v201, %v224
    %226 = vdwg.mxu0
    %v227 = vmax.f32 %v225, 0.0
    %v228 = vld [vmem:[%s11] sm:$0xff]
    %v229 = vld [vmem:[%s11 + $0x8] sm:$0xff]
    %v230 = vld [vmem:[%s12] sm:$0x1]
    %v232 = vperm.slane %v230, 0
    %v235 = vsel %vm165, %v227, 0
    %237 = vmatpush.msra.mxu0 0.0
    %238 = vmatpush.msra.mxu0 0.0
    %239 = vmatpush.msra.mxu0 0.0
    %240 = vmatpush.msra.mxu0 0.0
    %241 = vmatpush.msra.mxu0 0.0
    %242 = vmatpush.msra.mxu0 0.0
    %243 = vmatpush.msra.mxu0 0.0
    %244 = vmatpush.msra.mxu0 0.0
    %245 = vmatpush.msra.mxu0 0.0
    %246 = vmatpush.msra.mxu0 0.0
    %247 = vmatpush.msra.mxu0 0.0
    %248 = vmatpush.msra.mxu0 0.0
    %249 = vmatpush.msra.mxu0 0.0
    %250 = vmatpush.msra.mxu0 0.0
    %251 = vmatpush.msra.mxu0 %v229
    %252 = vmatpush.msra.mxu0 %v228
    %253 = vmatmul.f32.gmra.mxu0 %v235
    %v254 = vpop.f32.mrf.mxu0
    %v255 = vadd.f32 %v232, %v254
    %256 = vdwg.mxu0
    %257 = vset.pattern.permute.xlu0 1
    %258 = vperm.xlu0 %257, %v90
    %v259 = vpop.permute.xlu0 %258
    %v261 = vadd.f32 %v255, %v259
    %v262 = vld [vmem:[%s13] sm:$0xff]
    %v263 = vld [vmem:[%s13 + $0x8] sm:$0xff]
    %v264 = vld [vmem:[%s13 + $0x10] sm:$0xff]
    %v265 = vld [vmem:[%s13 + $0x18] sm:$0xff]
    %v266 = vld [vmem:[%s14] sm:$0x1]
    %v268 = vperm.slane %v266, 0
    %270 = vrot.lane.b32.xlu0 %v126, 64
    %v271 = vpop.permute.xlu0 %270
    %v272 = vsel %vm68, %v271, 0
    %274 = vmatpush.msra.mxu0 0.0
    %275 = vmatpush.msra.mxu0 0.0
    %276 = vmatpush.msra.mxu0 0.0
    %277 = vmatpush.msra.mxu0 0.0
    %278 = vmatpush.msra.mxu0 0.0
    %279 = vmatpush.msra.mxu0 0.0
    %280 = vmatpush.msra.mxu0 0.0
    %281 = vmatpush.msra.mxu0 0.0
    %282 = vmatpush.msra.mxu0 0.0
    %283 = vmatpush.msra.mxu0 0.0
    %284 = vmatpush.msra.mxu0 0.0
    %285 = vmatpush.msra.mxu0 0.0
    %286 = vmatpush.msra.mxu0 %v265
    %287 = vmatpush.msra.mxu0 %v264
    %288 = vmatpush.msra.mxu0 %v263
    %289 = vmatpush.msra.mxu0 %v262
    %290 = vmatmul.f32.gmra.mxu0 %v272
    %v291 = vpop.f32.mrf.mxu0
    %v292 = vadd.f32 %v268, %v291
    %293 = vdwg.mxu0
    %v294 = vmax.f32 %v292, 0.0
    %v295 = vld [vmem:[%s15] sm:$0xff]
    %v296 = vld [vmem:[%s15 + $0x8] sm:$0xff]
    %v297 = vld [vmem:[%s16] sm:$0x1]
    %v299 = vperm.slane %v297, 0
    %v302 = vsel %vm165, %v294, 0
    %304 = vmatpush.msra.mxu0 0.0
    %305 = vmatpush.msra.mxu0 0.0
    %306 = vmatpush.msra.mxu0 0.0
    %307 = vmatpush.msra.mxu0 0.0
    %308 = vmatpush.msra.mxu0 0.0
    %309 = vmatpush.msra.mxu0 0.0
    %310 = vmatpush.msra.mxu0 0.0
    %311 = vmatpush.msra.mxu0 0.0
    %312 = vmatpush.msra.mxu0 0.0
    %313 = vmatpush.msra.mxu0 0.0
    %314 = vmatpush.msra.mxu0 0.0
    %315 = vmatpush.msra.mxu0 0.0
    %316 = vmatpush.msra.mxu0 0.0
    %317 = vmatpush.msra.mxu0 0.0
    %318 = vmatpush.msra.mxu0 %v296
    %319 = vmatpush.msra.mxu0 %v295
    %320 = vmatmul.f32.gmra.mxu0 %v302
    %v321 = vpop.f32.mrf.mxu0
    %v322 = vadd.f32 %v299, %v321
    %323 = vdwg.mxu0
    %324 = vset.pattern.permute.xlu0 2
    %325 = vperm.xlu0 %324, %v90
    %v326 = vpop.permute.xlu0 %325
    %v328 = vadd.f32 %v322, %v326
    %330 = vrot.lane.b32.xlu0 %v261, 4
    %v331 = vpop.permute.xlu0 %330
    %334 = vrot.lane.b32.xlu0 %v328, 9
    %v335 = vpop.permute.xlu0 %334
    %vm337 = vcmask 31744
    %v338 = vsel %vm337, %v194, %v331
    %vm339 = vcmask 72704
    %v340 = vsel %vm339, %v338, %v335
    %vm341 = vcmask 97280
    %342 = vst.msk [vmem:[#allocation2] sm:$0xff] %vm341, %v340
    // Predicated region
    $region70: #{tpu_custom_call.1} parent=1 // pred_check
      _
    $region71: #{tpu_custom_call.1} parent=1 // pred_check_branch
      %344 = sbr.rel (0) target = $region73
    $region72: #{tpu_custom_call.1} parent=1 // pred_region
      %346 = vsyncadd [#allocation3], 0
      %s348 = sshll.u32 [#allocation2], 4
      %s349 = int_to_ptr.vmem [resolvable:$true] %s348
      %s350 = sshll.u32 %s17, 4
      %s351 = int_to_ptr.hbm [resolvable:$true] %s350
      %353 = dma.vmem_to_hbm [thread:$0]  %s349, 128, %s351, [#allocation3]
    $region73: #{tpu_custom_call.1} parent=1 // pred_fallthru
      _
    // Predicated region
    $region74: #{tpu_custom_call.1} parent=1 // pred_check
      _
    $region75: #{tpu_custom_call.1} parent=1 // pred_check_branch
      %355 = sbr.rel (0) target = $region77
    $region76: #{tpu_custom_call.1} parent=1 // pred_region
      _
    $region77: #{tpu_custom_call.1} parent=1 // pred_fallthru
      _
    // Predicated region
    $region78: #{tpu_custom_call.1} parent=1 // pred_check
      _
    $region79: #{tpu_custom_call.1} parent=1 // pred_check_branch
      %357 = sbr.rel (0) target = $region81
    $region80: #{tpu_custom_call.1} parent=1 // pred_region
      %359 = dma.done [#allocation3], 128
    $region81: #{tpu_custom_call.1} parent=1 // pred_fallthru
      _
    // Predicated region
    $region82: #{tpu_custom_call.1} parent=1 // pred_check
      _
    $region83: #{tpu_custom_call.1} parent=1 // pred_check_branch
      %361 = sbr.rel (0) target = $region85
    $region84: #{tpu_custom_call.1} parent=1 // pred_region
      _
    $region85: #{tpu_custom_call.1} parent=1 // pred_fallthru
      _
    %362 = vsyncpa [#allocation3], 1

</llo_original>
